<compile_context>
chip_gen: v6e
topology: v6e:2x2x1
jax: 0.10.0
libtpu: 0.0.40
codegen_flags: <defaults>
</compile_context>

<pallas_src>
import math
from functools import partial

import jax
import jax.numpy as jnp
from jax import lax
from jax.experimental import pallas as pl
from jax.experimental.pallas import tpu as pltpu


# Contract lhs dim 1 with rhs dim 1 ("A @ B.T"): lets the MXU consume x in its
# natural (batch, feature) layout; the layout change never touches HBM.
_NT_DIMS = (((1,), (1,)), ((), ()))


def _mlp_kernel(x_ref, w1_ref, b1_ref, w2_ref, b2_ref, w3_ref, b3_ref, o_ref,
                *, compute_dtype):
    # x_ref : (tile_b, D)  natural batch-major block (f32)
    # w1    : (h1, D) f32; w2: (h2, h1) cd; w3: (out, h2) cd; b_k: (out_k, 1) cd
    # o_ref : (out_dim, tile_b)  lane-dense output block
    x = x_ref[...]

    # Layer 1: (h1, D) x (tile_b, D)^T -> (h1, tile_b).  K = D = 3; the MXU has
    # enormous slack here, so keeping this matmul in f32 costs nothing.
    pre1 = lax.dot_general(w1_ref[...], x, _NT_DIMS,
                           preferred_element_type=jnp.float32)
    # Cast pre-activation to compute_dtype so tanh runs on the EUP in bf16 on
    # v6e/v7x (bias is already compute_dtype -> no silent f32 promotion).
    h1 = jnp.tanh(pre1.astype(compute_dtype) + b1_ref[...])

    pre2 = jnp.dot(w2_ref[...], h1, preferred_element_type=jnp.float32)
    h2 = jnp.tanh(pre2.astype(compute_dtype) + b2_ref[...])

    pre3 = jnp.dot(w3_ref[...], h2, preferred_element_type=jnp.float32)
    y = jnp.tanh(pre3.astype(compute_dtype) + b3_ref[...])

    o_ref[...] = y.astype(o_ref.dtype)


def _round_up(n, m):
    return ((n + m - 1) // m) * m


def _auto_compute_dtype():
    # tanh on the EUP is the binding unit.  v6e/v7x EUPs run bf16 at ~2x f32;
    # v5e (and older / unknown) has no bf16 VPU/EUP, so bf16 only adds casts.
    try:
        kind = jax.devices()[0].device_kind.lower()
    except Exception:
        return jnp.float32
    if any(tag in kind for tag in ("v6", "v7", "tpu7")):
        return jnp.bfloat16
    return jnp.float32


def ffnn_forward(x, params, *, tile_b=8192, compute_dtype=None,
                 transpose_output=True):
    """Run the ffnn forward pass with a single fused Pallas TPU kernel.

    x:      (B, input_dim) float32, any B (ragged last tile masked by Pallas).
    params: PyTorch nn.Linear layout: w_k (out, in), b_k (out, 1), float32.
    compute_dtype: None = auto (bf16 tanh on v6e/v7x, f32 on v5e/others).
    transpose_output: True -> (B, out_dim) (module semantics, tiny transpose);
                      False -> kernel-native lane-dense (out_dim, B), zero
                      wrapper-side copies.
    """
    if compute_dtype is None:
        compute_dtype = _auto_compute_dtype()

    B, D = x.shape
    # Pre-cast the ~5 KB of params once per call (not per grid step).
    w1 = params["w1"].astype(x.dtype)          # layer-1 matmul stays in input dtype
    b1 = params["b1"].astype(compute_dtype)
    w2 = params["w2"].astype(compute_dtype)
    b2 = params["b2"].astype(compute_dtype)
    w3 = params["w3"].astype(compute_dtype)
    b3 = params["b3"].astype(compute_dtype)
    h1, h2, out_dim = w1.shape[0], w2.shape[0], w3.shape[0]
    assert w1.shape[1] == D

    # Batch tile: lane-dense multiple of 128, large enough to amortize the
    # ~0.35 us per-grid-step overhead, capped so batches > 256 produce >= 2 grid
    # steps (both v7x TensorCores get work on the "parallel" axis), then
    # rebalanced to minimize wasted compute in the ragged last block.
    tile_b = max(128, (int(tile_b) // 128) * 128)
    if B > 256:
        tile_b = min(tile_b, _round_up(pl.cdiv(B, 2), 128))
    if B <= tile_b:
        tile_b = B                       # single full-array block (any B)
        num_tiles = 1
    else:
        num_tiles = pl.cdiv(B, tile_b)
        tile_b = _round_up(pl.cdiv(B, num_tiles), 128)
        num_tiles = pl.cdiv(B, tile_b)   # last block may be ragged; Pallas masks it

    def _full(shape):
        # Full-array block, same block every grid step (stays VMEM-resident).
        return pl.BlockSpec(shape, lambda i: (0, 0))

    flops = 2 * B * (D * h1 + h1 * h2 + h2 * out_dim)
    transcendentals = B * (h1 + h2 + out_dim)
    bytes_accessed = x.dtype.itemsize * B * (D + out_dim) + sum(
        int(a.size) * a.dtype.itemsize for a in (w1, b1, w2, b2, w3, b3))

    out_t = pl.pallas_call(
        partial(_mlp_kernel, compute_dtype=compute_dtype),
        out_shape=jax.ShapeDtypeStruct((out_dim, B), x.dtype),
        grid_spec=pltpu.PrefetchScalarGridSpec(
            num_scalar_prefetch=0,
            grid=(num_tiles,),
            in_specs=[
                # x in its natural layout: contiguous DMA, last dim == full D.
                pl.BlockSpec((tile_b, D), lambda i: (i, 0)),
                _full(w1.shape), _full(b1.shape),
                _full(w2.shape), _full(b2.shape),
                _full(w3.shape), _full(b3.shape),
            ],
            # Lane-dense output block: avoids masked vst.msk partial stores.
            out_specs=pl.BlockSpec((out_dim, tile_b), lambda i: (0, i)),
        ),
        compiler_params=pltpu.CompilerParams(
            dimension_semantics=("parallel",),
        ),
        cost_estimate=pl.CostEstimate(
            flops=flops,
            transcendentals=transcendentals,
            bytes_accessed=bytes_accessed,
        ),
    )(x, w1, b1, w2, b2, w3, b3)

    if not transpose_output:
        return out_t                     # (out_dim, B), no extra HBM traffic
    # Tiny (out_dim, B) transpose; the large (B, D) input never changed layout.
    return out_t.T


def init_ffnn_params(key, input_dim=3, hidden_layer_dims=(32, 32), output_dim=2):
    """Deterministic init mimicking nn.Linear's uniform(-1/sqrt(fan_in), ...).

    Weights in PyTorch's (out_features, in_features) layout; bias as (out, 1).
    """
    dims = [input_dim] + list(hidden_layer_dims) + [output_dim]
    params = {}
    for i in range(len(dims) - 1):
        fan_in, fan_out = dims[i], dims[i + 1]
        key, kw, kb = jax.random.split(key, 3)
        bound = 1.0 / math.sqrt(fan_in)
        params[f"w{i + 1}"] = jax.random.uniform(
            kw, (fan_out, fan_in), jnp.float32, -bound, bound)
        params[f"b{i + 1}"] = jax.random.uniform(
            kb, (fan_out, 1), jnp.float32, -bound, bound)
    return params


def ffnn_reference(x, params):
    h = jnp.tanh(x @ params["w1"].T + params["b1"].T)
    h = jnp.tanh(h @ params["w2"].T + params["b2"].T)
    return jnp.tanh(h @ params["w3"].T + params["b3"].T)


if __name__ == "__main__":
    key = jax.random.PRNGKey(0)
    k_params, k_x, k_x2 = jax.random.split(key, 3)

    input_dim, hidden, output_dim = 3, (32, 32), 2
    params = init_ffnn_params(k_params, input_dim, hidden, output_dim)

    # 1) Small batch (single full-array block path), exact f32 check.
    x = jax.random.normal(k_x, (16, input_dim), jnp.float32)
    out = jax.block_until_ready(ffnn_forward(x, params, compute_dtype=jnp.float32))
    ref = ffnn_reference(x, params)
    assert out.shape == (16, output_dim)
    assert jnp.allclose(out, ref, atol=1e-5, rtol=1e-5), "f32 small-batch mismatch"

    # 2) Multi-tile path with a ragged last block (272 = 2*128 + 16), f32.
    x2 = jax.random.normal(k_x2, (272, input_dim), jnp.float32)
    out2 = jax.block_until_ready(
        ffnn_forward(x2, params, tile_b=128, compute_dtype=jnp.float32))
    ref2 = ffnn_reference(x2, params)
    assert out2.shape == (272, output_dim)
    assert jnp.allclose(out2, ref2, atol=1e-5, rtol=1e-5), "ragged-tile mismatch"

    # 3) Default (auto) dtype path: bf16 tanh on v6e/v7x, f32 elsewhere.
    out_auto = jax.block_until_ready(ffnn_forward(x, params))
    auto_dtype = _auto_compute_dtype()
    tol = 1e-5 if auto_dtype == jnp.float32 else 1e-1   # bf16 tanh -> looser check
    assert out_auto.shape == (16, output_dim)
    assert jnp.allclose(out_auto.astype(jnp.float32), ref, atol=tol, rtol=tol), \
        "auto-dtype mismatch"

    print("KERNEL_OK")
</pallas_src>

<mosaic_0001>
module attributes {stable_mosaic.version = 11 : i64} {
  func.func @_mlp_kernel(%arg0: i32, %arg1: memref<16x3xf32, #tpu.memory_space<vmem>>, %arg2: memref<32x3xf32, #tpu.memory_space<vmem>>, %arg3: memref<32x1xf32, #tpu.memory_space<vmem>>, %arg4: memref<32x32xf32, #tpu.memory_space<vmem>>, %arg5: memref<32x1xf32, #tpu.memory_space<vmem>>, %arg6: memref<2x32xf32, #tpu.memory_space<vmem>>, %arg7: memref<2x1xf32, #tpu.memory_space<vmem>>, %arg8: memref<2x16xf32, #tpu.memory_space<vmem>>) attributes {dimension_semantics = [#tpu.dimension_semantics<parallel>], iteration_bounds = array<i64: 1>, scalar_prefetch = 0 : i64, scratch_operands = 0 : i64, tpu.core_type = #tpu.core_type<tc>, window_params = [{transform_indices = @transform_0, window_bounds = array<i64: 16, 3>}, {pipeline_mode = #tpu.pipeline_mode<synchronous>, transform_indices = @transform_1, window_bounds = array<i64: 32, 3>}, {pipeline_mode = #tpu.pipeline_mode<synchronous>, transform_indices = @transform_2, window_bounds = array<i64: 32, 1>}, {pipeline_mode = #tpu.pipeline_mode<synchronous>, transform_indices = @transform_3, window_bounds = array<i64: 32, 32>}, {pipeline_mode = #tpu.pipeline_mode<synchronous>, transform_indices = @transform_4, window_bounds = array<i64: 32, 1>}, {pipeline_mode = #tpu.pipeline_mode<synchronous>, transform_indices = @transform_5, window_bounds = array<i64: 2, 32>}, {pipeline_mode = #tpu.pipeline_mode<synchronous>, transform_indices = @transform_6, window_bounds = array<i64: 2, 1>}, {transform_indices = @transform_7, window_bounds = array<i64: 2, 16>}]} {
    %c0 = arith.constant 0 : index
    %c0_0 = arith.constant 0 : index
    %0 = vector.load %arg1[%c0, %c0_0] : memref<16x3xf32, #tpu.memory_space<vmem>>, vector<16x3xf32>
    %c0_1 = arith.constant 0 : index
    %c0_2 = arith.constant 0 : index
    %1 = vector.load %arg2[%c0_1, %c0_2] : memref<32x3xf32, #tpu.memory_space<vmem>>, vector<32x3xf32>
    %cst = arith.constant dense<0.000000e+00> : vector<32x16xf32>
    %2 = tpu.matmul %1, %0, %cst {dimension_numbers = #tpu.dot_dimension_numbers<[1], [1], [0], [0], [0, 0, 1, 0], [], []>} : vector<32x3xf32>, vector<16x3xf32>, vector<32x16xf32> -> vector<32x16xf32>
    %c0_3 = arith.constant 0 : index
    %c0_4 = arith.constant 0 : index
    %3 = vector.load %arg3[%c0_3, %c0_4] : memref<32x1xf32, #tpu.memory_space<vmem>>, vector<32x1xf32>
    %4 = vector.broadcast %3 : vector<32x1xf32> to vector<32x16xf32>
    %5 = arith.addf %2, %4 : vector<32x16xf32>
    %6 = math.tanh %5 : vector<32x16xf32>
    %c0_5 = arith.constant 0 : index
    %c0_6 = arith.constant 0 : index
    %7 = vector.load %arg4[%c0_5, %c0_6] : memref<32x32xf32, #tpu.memory_space<vmem>>, vector<32x32xf32>
    %cst_7 = arith.constant dense<0.000000e+00> : vector<32x16xf32>
    %8 = tpu.matmul %7, %6, %cst_7 {dimension_numbers = #tpu.dot_dimension_numbers<[1], [0], [0], [1], [0, 0, 1, 1], [], []>} : vector<32x32xf32>, vector<32x16xf32>, vector<32x16xf32> -> vector<32x16xf32>
    %c0_8 = arith.constant 0 : index
    %c0_9 = arith.constant 0 : index
    %9 = vector.load %arg5[%c0_8, %c0_9] : memref<32x1xf32, #tpu.memory_space<vmem>>, vector<32x1xf32>
    %10 = vector.broadcast %9 : vector<32x1xf32> to vector<32x16xf32>
    %11 = arith.addf %8, %10 : vector<32x16xf32>
    %12 = math.tanh %11 : vector<32x16xf32>
    %c0_10 = arith.constant 0 : index
    %c0_11 = arith.constant 0 : index
    %13 = vector.load %arg6[%c0_10, %c0_11] : memref<2x32xf32, #tpu.memory_space<vmem>>, vector<2x32xf32>
    %cst_12 = arith.constant dense<0.000000e+00> : vector<2x16xf32>
    %14 = tpu.matmul %13, %12, %cst_12 {dimension_numbers = #tpu.dot_dimension_numbers<[1], [0], [0], [1], [0, 0, 1, 1], [], []>} : vector<2x32xf32>, vector<32x16xf32>, vector<2x16xf32> -> vector<2x16xf32>
    %c0_13 = arith.constant 0 : index
    %c0_14 = arith.constant 0 : index
    %15 = vector.load %arg7[%c0_13, %c0_14] : memref<2x1xf32, #tpu.memory_space<vmem>>, vector<2x1xf32>
    %16 = vector.broadcast %15 : vector<2x1xf32> to vector<2x16xf32>
    %17 = arith.addf %14, %16 : vector<2x16xf32>
    %18 = math.tanh %17 : vector<2x16xf32>
    %c0_15 = arith.constant 0 : index
    %c0_16 = arith.constant 0 : index
    %19 = vector.load %arg8[%c0_15, %c0_16] : memref<2x16xf32, #tpu.memory_space<vmem>>, vector<2x16xf32>
    tpu.vector_store %arg8[%c0_15, %c0_16], %18 {strides = array<i32>} : memref<2x16xf32, #tpu.memory_space<vmem>>, vector<2x16xf32>,
    return
  }
  func.func @transform_0(%arg0: i32) -> (i32, i32) {
    %c0_i32 = arith.constant 0 : i32
    %c0_i32_0 = arith.constant 0 : i32
    return %arg0, %c0_i32 : i32, i32
  }
  func.func @transform_1(%arg0: i32) -> (i32, i32) {
    %c0_i32 = arith.constant 0 : i32
    %c0_i32_0 = arith.constant 0 : i32
    %c0_i32_1 = arith.constant 0 : i32
    return %c0_i32, %c0_i32_0 : i32, i32
  }
  func.func @transform_2(%arg0: i32) -> (i32, i32) {
    %c0_i32 = arith.constant 0 : i32
    %c0_i32_0 = arith.constant 0 : i32
    %c0_i32_1 = arith.constant 0 : i32
    return %c0_i32, %c0_i32_0 : i32, i32
  }
  func.func @transform_3(%arg0: i32) -> (i32, i32) {
    %c0_i32 = arith.constant 0 : i32
    %c0_i32_0 = arith.constant 0 : i32
    %c0_i32_1 = arith.constant 0 : i32
    return %c0_i32, %c0_i32_0 : i32, i32
  }
  func.func @transform_4(%arg0: i32) -> (i32, i32) {
    %c0_i32 = arith.constant 0 : i32
    %c0_i32_0 = arith.constant 0 : i32
    %c0_i32_1 = arith.constant 0 : i32
    return %c0_i32, %c0_i32_0 : i32, i32
  }
  func.func @transform_5(%arg0: i32) -> (i32, i32) {
    %c0_i32 = arith.constant 0 : i32
    %c0_i32_0 = arith.constant 0 : i32
    %c0_i32_1 = arith.constant 0 : i32
    return %c0_i32, %c0_i32_0 : i32, i32
  }
  func.func @transform_6(%arg0: i32) -> (i32, i32) {
    %c0_i32 = arith.constant 0 : i32
    %c0_i32_0 = arith.constant 0 : i32
    %c0_i32_1 = arith.constant 0 : i32
    return %c0_i32, %c0_i32_0 : i32, i32
  }
  func.func @transform_7(%arg0: i32) -> (i32, i32) {
    %c0_i32 = arith.constant 0 : i32
    %c0_i32_0 = arith.constant 0 : i32
    return %c0_i32, %arg0 : i32, i32
  }
}

</mosaic_0001>

<llo_original>
// kernel: tpu_custom_call.1
$region0: #{tpu_custom_call.1}
  #allocation0 [shape = 'u32[]', space=smem, size = 0x4, offset = 0x4, fixed_abs, tag = 'smem constant byte address 0x4 - core index']
  #allocation1 [shape = 'u32[144,128]{1,0:T(1,128)}', space=vmem, size = 0x12000, scoped, tag = 'internal scratch']
  %s0 = inlined_call_operand.vmem [shape: f32[16,3], index: 0, kind: input, shape index: {}]
  %s1 = inlined_call_operand.vmem [shape: f32[32,3], index: 1, kind: input, shape index: {}]
  %s2 = inlined_call_operand.vmem [shape: f32[32,1], index: 2, kind: input, shape index: {}]
  %s3 = inlined_call_operand.vmem [shape: f32[32,32], index: 3, kind: input, shape index: {}]
  %s4 = inlined_call_operand.vmem [shape: f32[32,1], index: 4, kind: input, shape index: {}]
  %s5 = inlined_call_operand.vmem [shape: f32[2,32], index: 5, kind: input, shape index: {}]
  %s6 = inlined_call_operand.vmem [shape: f32[2,1], index: 6, kind: input, shape index: {}]
  %s7 = inlined_call_operand.hbm [shape: f32[2,16], index: 7, kind: output, shape index: {}]
  %s8 = sld [smem:[#allocation0]]
  $region38: #{tpu_custom_call.1} parent=0
    _
  %s10 = ssub.s32 1, %s8
  %s11 = scalar_select 0, %s10, %s8
  $region1: #{tpu_custom_call.1} parent=0
    #allocation2 [shape = 'u8[1024]{0}', space=vmem, size = 0x400, scoped, tag = 'output window, operand 0, single buffered']
    #allocation3 [shape = 's32[1]{0}', space=sflag, size = 0x4, scoped, tag = 'scoped memory for tpu_custom_call.1']
    %12 = vsyncpa [#allocation3], 0
    // Predicated region
    $region2: #{tpu_custom_call.1} parent=1 // pred_check
      _
    $region3: #{tpu_custom_call.1} parent=1 // pred_check_branch
      %14 = sbr.rel (0) target = $region5
    $region4: #{tpu_custom_call.1} parent=1 // pred_region
      _
    $region5: #{tpu_custom_call.1} parent=1 // pred_fallthru
      _
    // Predicated region
    $region6: #{tpu_custom_call.1} parent=1 // pred_check
      _
    $region7: #{tpu_custom_call.1} parent=1 // pred_check_branch
      %16 = sbr.rel (0) target = $region9
    $region8: #{tpu_custom_call.1} parent=1 // pred_region
      _
    $region9: #{tpu_custom_call.1} parent=1 // pred_fallthru
      _
    // Predicated region
    $region10: #{tpu_custom_call.1} parent=1 // pred_check
      _
    $region11: #{tpu_custom_call.1} parent=1 // pred_check_branch
      %18 = sbr.rel (0) target = $region13
    $region12: #{tpu_custom_call.1} parent=1 // pred_region
      _
    $region13: #{tpu_custom_call.1} parent=1 // pred_fallthru
      _
    // Predicated region
    $region14: #{tpu_custom_call.1} parent=1 // pred_check
      _
    $region15: #{tpu_custom_call.1} parent=1 // pred_check_branch
      %20 = sbr.rel (0) target = $region17
    $region16: #{tpu_custom_call.1} parent=1 // pred_region
      _
    $region17: #{tpu_custom_call.1} parent=1 // pred_fallthru
      _
    // Predicated region
    $region18: #{tpu_custom_call.1} parent=1 // pred_check
      _
    $region19: #{tpu_custom_call.1} parent=1 // pred_check_branch
      %22 = sbr.rel (0) target = $region21
    $region20: #{tpu_custom_call.1} parent=1 // pred_region
      _
    $region21: #{tpu_custom_call.1} parent=1 // pred_fallthru
      _
    // Predicated region
    $region22: #{tpu_custom_call.1} parent=1 // pred_check
      _
    $region23: #{tpu_custom_call.1} parent=1 // pred_check_branch
      %24 = sbr.rel (0) target = $region25
    $region24: #{tpu_custom_call.1} parent=1 // pred_region
      _
    $region25: #{tpu_custom_call.1} parent=1 // pred_fallthru
      _
    // Predicated region
    $region26: #{tpu_custom_call.1} parent=1 // pred_check
      _
    $region27: #{tpu_custom_call.1} parent=1 // pred_check_branch
      %26 = sbr.rel (0) target = $region29
    $region28: #{tpu_custom_call.1} parent=1 // pred_region
      _
    $region29: #{tpu_custom_call.1} parent=1 // pred_fallthru
      _
    %v27 = vld [vmem:[%s0] sm:$0xff]
    %v28 = vld [vmem:[%s0 + $0x8] sm:$0xff]
    %v29 = vld [vmem:[%s1] sm:$0xff]
    %v30 = vld [vmem:[%s1 + $0x8] sm:$0xff]
    %v31 = vld [vmem:[%s1 + $0x10] sm:$0xff]
    %v32 = vld [vmem:[%s1 + $0x18] sm:$0xff]
    %v33 = vld [vmem:[%s2] sm:$0xff]
    %v34 = vld [vmem:[%s2 + $0x8] sm:$0xff]
    %v35 = vld [vmem:[%s2 + $0x10] sm:$0xff]
    %v36 = vld [vmem:[%s2 + $0x18] sm:$0xff]
    %38 = vset.pattern.permute.xlu0 0
    %39 = vperm.xlu0 %38, %v33
    %v40 = vpop.permute.xlu0 %39
    %43 = vset.pattern.permute.xlu0 0
    %44 = vperm.xlu0 %43, %v34
    %v45 = vpop.permute.xlu0 %44
    %48 = vset.pattern.permute.xlu0 0
    %49 = vperm.xlu0 %48, %v35
    %v50 = vpop.permute.xlu0 %49
    %53 = vset.pattern.permute.xlu0 0
    %54 = vperm.xlu0 %53, %v36
    %v55 = vpop.permute.xlu0 %54
    %vm57 = vcmask 23552
    %v59 = vsel %vm57, %v29, 0
    %v62 = vsel %vm57, %v30, 0
    %v65 = vsel %vm57, %v31, 0
    %v68 = vsel %vm57, %v32, 0
    %v71 = vsel %vm57, %v27, 0
    %v74 = vsel %vm57, %v28, 0
    %76 = vmatprep.subr.mxu0 0.0
    %77 = vmatpush1.xpose.msra.mxu0 0.0
    %78 = vmatprep.subr.mxu0 0.0
    %79 = vmatpush1.xpose.msra.mxu0 0.0
    %80 = vmatprep.subr.mxu0 0.0
    %81 = vmatpush1.xpose.msra.mxu0 0.0
    %82 = vmatprep.subr.mxu0 0.0
    %83 = vmatpush1.xpose.msra.mxu0 0.0
    %84 = vmatprep.subr.mxu0 0.0
    %85 = vmatpush1.xpose.msra.mxu0 0.0
    %86 = vmatprep.subr.mxu0 0.0
    %87 = vmatpush1.xpose.msra.mxu0 0.0
    %88 = vmatprep.subr.mxu0 0.0
    %89 = vmatpush1.xpose.msra.mxu0 0.0
    %90 = vmatprep.subr.mxu0 0.0
    %91 = vmatpush1.xpose.msra.mxu0 0.0
    %92 = vmatprep.subr.mxu0 0.0
    %93 = vmatpush1.xpose.msra.mxu0 0.0
    %94 = vmatprep.subr.mxu0 0.0
    %95 = vmatpush1.xpose.msra.mxu0 0.0
    %96 = vmatprep.subr.mxu0 0.0
    %97 = vmatpush1.xpose.msra.mxu0 0.0
    %98 = vmatprep.subr.mxu0 0.0
    %99 = vmatpush1.xpose.msra.mxu0 0.0
    %100 = vmatprep.subr.mxu0 0.0
    %101 = vmatpush1.xpose.msra.mxu0 0.0
    %102 = vmatprep.subr.mxu0 0.0
    %103 = vmatpush1.xpose.msra.mxu0 0.0
    %104 = vmatprep.subr.mxu0 0.0
    %105 = vmatpush1.xpose.msra.mxu0 %v74
    %106 = vmatprep.subr.mxu0 0.0
    %107 = vmatpush1.xpose.msra.mxu0 %v71
    %108 = vmatprep.subr.mxu0 0.0
    %109 = vmatpush2.xpose.msra.mxu0 0.0
    %110 = vmatprep.subr.mxu0 0.0
    %111 = vmatpush2.xpose.msra.mxu0 0.0
    %112 = vmatprep.subr.mxu0 0.0
    %113 = vmatpush2.xpose.msra.mxu0 0.0
    %114 = vmatprep.subr.mxu0 0.0
    %115 = vmatpush2.xpose.msra.mxu0 0.0
    %116 = vmatprep.subr.mxu0 0.0
    %117 = vmatpush2.xpose.msra.mxu0 0.0
    %118 = vmatprep.subr.mxu0 0.0
    %119 = vmatpush2.xpose.msra.mxu0 0.0
    %120 = vmatprep.subr.mxu0 0.0
    %121 = vmatpush2.xpose.msra.mxu0 0.0
    %122 = vmatprep.subr.mxu0 0.0
    %123 = vmatpush2.xpose.msra.mxu0 0.0
    %124 = vmatprep.subr.mxu0 0.0
    %125 = vmatpush2.xpose.msra.mxu0 0.0
    %126 = vmatprep.subr.mxu0 0.0
    %127 = vmatpush2.xpose.msra.mxu0 0.0
    %128 = vmatprep.subr.mxu0 0.0
    %129 = vmatpush2.xpose.msra.mxu0 0.0
    %130 = vmatprep.subr.mxu0 0.0
    %131 = vmatpush2.xpose.msra.mxu0 0.0
    %132 = vmatprep.subr.mxu0 0.0
    %133 = vmatpush2.xpose.msra.mxu0 0.0
    %134 = vmatprep.subr.mxu0 0.0
    %135 = vmatpush2.xpose.msra.mxu0 0.0
    %136 = vmatprep.subr.mxu0 0.0
    %137 = vmatpush2.xpose.msra.mxu0 0.0
    %138 = vmatprep.subr.mxu0 0.0
    %139 = vmatpush2.xpose.msra.mxu0 0.0
    %140 = vmatprep.mubr.f32.mxu0 0.0
    %141 = vmatmul.mubr.f32.gmra.mxu0 %v59
    %v142 = vpop.f32.mrf.mxu0
    %v143 = vadd.f32 %v40, %v142
    %v144 = vpop.f32.mrf.mxu0
    %145 = vmatprep.mubr.f32.mxu0 0.0
    %146 = vmatmul.mubr.f32.gmra.mxu0 %v62
    %v147 = vpop.f32.mrf.mxu0
    %v148 = vadd.f32 %v45, %v147
    %v149 = vpop.f32.mrf.mxu0
    %150 = vmatprep.mubr.f32.mxu0 0.0
    %151 = vmatmul.mubr.f32.gmra.mxu0 %v65
    %v152 = vpop.f32.mrf.mxu0
    %v153 = vadd.f32 %v50, %v152
    %v154 = vpop.f32.mrf.mxu0
    %155 = vmatprep.mubr.f32.mxu0 0.0
    %156 = vmatmul.mubr.f32.gmra.mxu0 %v68
    %v157 = vpop.f32.mrf.mxu0
    %v158 = vadd.f32 %v55, %v157
    %v159 = vpop.f32.mrf.mxu0
    %160 = vdwg.mxu0
    %v161 = vtanh.pop %v143
    %v162 = vtanh.pop %v148
    %v163 = vtanh.pop %v153
    %v164 = vtanh.pop %v158
    %v165 = vld [vmem:[%s3] sm:$0xff]
    %v166 = vld [vmem:[%s3 + $0x8] sm:$0xff]
    %v167 = vld [vmem:[%s3 + $0x10] sm:$0xff]
    %v168 = vld [vmem:[%s3 + $0x18] sm:$0xff]
    %v169 = vld [vmem:[%s4] sm:$0xff]
    %v170 = vld [vmem:[%s4 + $0x8] sm:$0xff]
    %v171 = vld [vmem:[%s4 + $0x10] sm:$0xff]
    %v172 = vld [vmem:[%s4 + $0x18] sm:$0xff]
    %174 = vset.pattern.permute.xlu0 0
    %175 = vperm.xlu0 %174, %v169
    %v176 = vpop.permute.xlu0 %175
    %179 = vset.pattern.permute.xlu0 0
    %180 = vperm.xlu0 %179, %v170
    %v181 = vpop.permute.xlu0 %180
    %184 = vset.pattern.permute.xlu0 0
    %185 = vperm.xlu0 %184, %v171
    %v186 = vpop.permute.xlu0 %185
    %189 = vset.pattern.permute.xlu0 0
    %190 = vperm.xlu0 %189, %v172
    %v191 = vpop.permute.xlu0 %190
    %vm193 = vcmask 261120
    %v195 = vsel %vm193, %v165, 0
    %v198 = vsel %vm193, %v166, 0
    %v201 = vsel %vm193, %v167, 0
    %v204 = vsel %vm193, %v168, 0
    %206 = vmatprep.subr.mxu0 0.0
    %207 = vmatpush1.msra.mxu0 0.0
    %208 = vmatprep.subr.mxu0 0.0
    %209 = vmatpush1.msra.mxu0 0.0
    %210 = vmatprep.subr.mxu0 0.0
    %211 = vmatpush1.msra.mxu0 0.0
    %212 = vmatprep.subr.mxu0 0.0
    %213 = vmatpush1.msra.mxu0 0.0
    %214 = vmatprep.subr.mxu0 0.0
    %215 = vmatpush1.msra.mxu0 0.0
    %216 = vmatprep.subr.mxu0 0.0
    %217 = vmatpush1.msra.mxu0 0.0
    %218 = vmatprep.subr.mxu0 0.0
    %219 = vmatpush1.msra.mxu0 0.0
    %220 = vmatprep.subr.mxu0 0.0
    %221 = vmatpush1.msra.mxu0 0.0
    %222 = vmatprep.subr.mxu0 0.0
    %223 = vmatpush1.msra.mxu0 0.0
    %224 = vmatprep.subr.mxu0 0.0
    %225 = vmatpush1.msra.mxu0 0.0
    %226 = vmatprep.subr.mxu0 0.0
    %227 = vmatpush1.msra.mxu0 0.0
    %228 = vmatprep.subr.mxu0 0.0
    %229 = vmatpush1.msra.mxu0 0.0
    %230 = vmatprep.subr.mxu0 0.0
    %231 = vmatpush1.msra.mxu0 %v164
    %232 = vmatprep.subr.mxu0 0.0
    %233 = vmatpush1.msra.mxu0 %v163
    %234 = vmatprep.subr.mxu0 0.0
    %235 = vmatpush1.msra.mxu0 %v162
    %236 = vmatprep.subr.mxu0 0.0
    %237 = vmatpush1.msra.mxu0 %v161
    %238 = vmatprep.subr.mxu0 0.0
    %239 = vmatpush2.msra.mxu0 0.0
    %240 = vmatprep.subr.mxu0 0.0
    %241 = vmatpush2.msra.mxu0 0.0
    %242 = vmatprep.subr.mxu0 0.0
    %243 = vmatpush2.msra.mxu0 0.0
    %244 = vmatprep.subr.mxu0 0.0
    %245 = vmatpush2.msra.mxu0 0.0
    %246 = vmatprep.subr.mxu0 0.0
    %247 = vmatpush2.msra.mxu0 0.0
    %248 = vmatprep.subr.mxu0 0.0
    %249 = vmatpush2.msra.mxu0 0.0
    %250 = vmatprep.subr.mxu0 0.0
    %251 = vmatpush2.msra.mxu0 0.0
    %252 = vmatprep.subr.mxu0 0.0
    %253 = vmatpush2.msra.mxu0 0.0
    %254 = vmatprep.subr.mxu0 0.0
    %255 = vmatpush2.msra.mxu0 0.0
    %256 = vmatprep.subr.mxu0 0.0
    %257 = vmatpush2.msra.mxu0 0.0
    %258 = vmatprep.subr.mxu0 0.0
    %259 = vmatpush2.msra.mxu0 0.0
    %260 = vmatprep.subr.mxu0 0.0
    %261 = vmatpush2.msra.mxu0 0.0
    %262 = vmatprep.subr.mxu0 0.0
    %263 = vmatpush2.msra.mxu0 0.0
    %264 = vmatprep.subr.mxu0 0.0
    %265 = vmatpush2.msra.mxu0 0.0
    %266 = vmatprep.subr.mxu0 0.0
    %267 = vmatpush2.msra.mxu0 0.0
    %268 = vmatprep.subr.mxu0 0.0
    %269 = vmatpush2.msra.mxu0 0.0
    %270 = vmatprep.mubr.f32.mxu0 0.0
    %271 = vmatmul.mubr.f32.gmra.mxu0 %v195
    %v272 = vpop.f32.mrf.mxu0
    %v273 = vadd.f32 %v176, %v272
    %v274 = vpop.f32.mrf.mxu0
    %275 = vmatprep.mubr.f32.mxu0 0.0
    %276 = vmatmul.mubr.f32.gmra.mxu0 %v198
    %v277 = vpop.f32.mrf.mxu0
    %v278 = vadd.f32 %v181, %v277
    %v279 = vpop.f32.mrf.mxu0
    %280 = vmatprep.mubr.f32.mxu0 0.0
    %281 = vmatmul.mubr.f32.gmra.mxu0 %v201
    %v282 = vpop.f32.mrf.mxu0
    %v283 = vadd.f32 %v186, %v282
    %v284 = vpop.f32.mrf.mxu0
    %285 = vmatprep.mubr.f32.mxu0 0.0
    %286 = vmatmul.mubr.f32.gmra.mxu0 %v204
    %v287 = vpop.f32.mrf.mxu0
    %v288 = vadd.f32 %v191, %v287
    %v289 = vpop.f32.mrf.mxu0
    %290 = vdwg.mxu0
    %v291 = vtanh.pop %v273
    %v292 = vtanh.pop %v278
    %v293 = vtanh.pop %v283
    %v294 = vtanh.pop %v288
    %v295 = vld [vmem:[%s5] sm:$0x3]
    %v296 = vld [vmem:[%s6] sm:$0x3]
    %298 = vset.pattern.permute.xlu0 0
    %299 = vperm.xlu0 %298, %v296
    %v300 = vpop.permute.xlu0 %299
    %v303 = vsel %vm193, %v295, 0
    %305 = vmatprep.subr.mxu0 0.0
    %306 = vmatpush1.msra.mxu0 0.0
    %307 = vmatprep.subr.mxu0 0.0
    %308 = vmatpush1.msra.mxu0 0.0
    %309 = vmatprep.subr.mxu0 0.0
    %310 = vmatpush1.msra.mxu0 0.0
    %311 = vmatprep.subr.mxu0 0.0
    %312 = vmatpush1.msra.mxu0 0.0
    %313 = vmatprep.subr.mxu0 0.0
    %314 = vmatpush1.msra.mxu0 0.0
    %315 = vmatprep.subr.mxu0 0.0
    %316 = vmatpush1.msra.mxu0 0.0
    %317 = vmatprep.subr.mxu0 0.0
    %318 = vmatpush1.msra.mxu0 0.0
    %319 = vmatprep.subr.mxu0 0.0
    %320 = vmatpush1.msra.mxu0 0.0
    %321 = vmatprep.subr.mxu0 0.0
    %322 = vmatpush1.msra.mxu0 0.0
    %323 = vmatprep.subr.mxu0 0.0
    %324 = vmatpush1.msra.mxu0 0.0
    %325 = vmatprep.subr.mxu0 0.0
    %326 = vmatpush1.msra.mxu0 0.0
    %327 = vmatprep.subr.mxu0 0.0
    %328 = vmatpush1.msra.mxu0 0.0
    %329 = vmatprep.subr.mxu0 0.0
    %330 = vmatpush1.msra.mxu0 %v294
    %331 = vmatprep.subr.mxu0 0.0
    %332 = vmatpush1.msra.mxu0 %v293
    %333 = vmatprep.subr.mxu0 0.0
    %334 = vmatpush1.msra.mxu0 %v292
    %335 = vmatprep.subr.mxu0 0.0
    %336 = vmatpush1.msra.mxu0 %v291
    %337 = vmatprep.subr.mxu0 0.0
    %338 = vmatpush2.msra.mxu0 0.0
    %339 = vmatprep.subr.mxu0 0.0
    %340 = vmatpush2.msra.mxu0 0.0
    %341 = vmatprep.subr.mxu0 0.0
    %342 = vmatpush2.msra.mxu0 0.0
    %343 = vmatprep.subr.mxu0 0.0
    %344 = vmatpush2.msra.mxu0 0.0
    %345 = vmatprep.subr.mxu0 0.0
    %346 = vmatpush2.msra.mxu0 0.0
    %347 = vmatprep.subr.mxu0 0.0
    %348 = vmatpush2.msra.mxu0 0.0
    %349 = vmatprep.subr.mxu0 0.0
    %350 = vmatpush2.msra.mxu0 0.0
    %351 = vmatprep.subr.mxu0 0.0
    %352 = vmatpush2.msra.mxu0 0.0
    %353 = vmatprep.subr.mxu0 0.0
    %354 = vmatpush2.msra.mxu0 0.0
    %355 = vmatprep.subr.mxu0 0.0
    %356 = vmatpush2.msra.mxu0 0.0
    %357 = vmatprep.subr.mxu0 0.0
    %358 = vmatpush2.msra.mxu0 0.0
    %359 = vmatprep.subr.mxu0 0.0
    %360 = vmatpush2.msra.mxu0 0.0
    %361 = vmatprep.subr.mxu0 0.0
    %362 = vmatpush2.msra.mxu0 0.0
    %363 = vmatprep.subr.mxu0 0.0
    %364 = vmatpush2.msra.mxu0 0.0
    %365 = vmatprep.subr.mxu0 0.0
    %366 = vmatpush2.msra.mxu0 0.0
    %367 = vmatprep.subr.mxu0 0.0
    %368 = vmatpush2.msra.mxu0 0.0
    %369 = vmatprep.mubr.f32.mxu0 0.0
    %370 = vmatmul.mubr.f32.gmra.mxu0 %v303
    %v371 = vpop.f32.mrf.mxu0
    %v372 = vadd.f32 %v300, %v371
    %v373 = vpop.f32.mrf.mxu0
    %374 = vdwg.mxu0
    %v375 = vtanh.pop %v372
    %vm376 = vcmask 123904
    %377 = vst.msk [vmem:[#allocation2] sm:$0x3] %vm376, %v375
    // Predicated region
    $region30: #{tpu_custom_call.1} parent=1 // pred_check
      _
    $region31: #{tpu_custom_call.1} parent=1 // pred_check_branch
      %379 = sbr.rel (0) target = $region33
    $region32: #{tpu_custom_call.1} parent=1 // pred_region
      %s381 = ssub.s32 32, 32
      %382 = vsyncadd [#allocation3], %s381
      %s384 = sshll.u32 [#allocation2], 4
      %s385 = int_to_ptr.vmem [resolvable:$true] %s384
      %387 = dma.vmem_to_hbm [thread:$0]  %s385, 32, %s7, [#allocation3]
    $region33: #{tpu_custom_call.1} parent=1 // pred_fallthru
      _
    // Predicated region
    $region34: #{tpu_custom_call.1} parent=1 // pred_check
      _
    $region35: #{tpu_custom_call.1} parent=1 // pred_check_branch
      %389 = sbr.rel (0) target = $region37
    $region36: #{tpu_custom_call.1} parent=1 // pred_region
      %390 = dma.done [#allocation3], 32
    $region37: #{tpu_custom_call.1} parent=1 // pred_fallthru
      _
    %391 = vsyncpa [#allocation3], 1

</llo_original>
